<compile_context>
chip_gen: v5e
topology: v5e:2x2
jax: 0.10.0
libtpu: 0.0.40
codegen_flags: <defaults>
</compile_context>

<pallas_src>
import jax
import jax.numpy as jnp
from jax import lax
from jax.experimental import pallas as pl
from jax.experimental.pallas import tpu as pltpu


def sa_kernel(x_q_ref, x_ref, a_t_ref, u_ref, w3_ref, b3_ref, gamma_ref, o_ref):
    """One (batch, query-tile) step of SAGAN self-attention, (C, N) layout.

    x_q_ref : (C, TQ) f32   query tile of x (also the residual)
    x_ref   : (C, N)  f32   full x for this batch element (keys + values)
    a_t_ref : (C, C)        A^T = W2^T W1 (matmul dtype)
    u_ref   : (1, C)        b1^T W2       (matmul dtype)
    w3_ref  : (C, C)        W3            (matmul dtype)
    b3_ref  : (C, 1)  f32   value bias
    gamma_ref : (1,)  f32   SMEM scalar
    o_ref   : (C, TQ)       output tile
    """
    xq_f32 = x_q_ref[...]                         # (C, TQ) residual path, f32
    xf_f32 = x_ref[...]                           # (C, N)

    mm_dtype = a_t_ref.dtype                      # bf16 by default, f32 optional
    xq = xq_f32.astype(mm_dtype)
    xf = xf_f32.astype(mm_dtype)

    # scores: S[i, j] = x_i^T (W1^T W2) x_j + (b1^T W2) x_j
    # (row-constant bias terms of q^T k cancel under softmax over j)
    z = jnp.dot(a_t_ref[...], xq, preferred_element_type=jnp.float32)      # (C, TQ)
    s = lax.dot_general(z.astype(mm_dtype), xf,
                        (((0,), (0,)), ((), ())),
                        preferred_element_type=jnp.float32)                # (TQ, N)
    ck = jnp.dot(u_ref[...], xf, preferred_element_type=jnp.float32)       # (1, N)
    s = s + ck                                                             # bcast rows

    # softmax over keys (full key axis resident -> exact, no online accum)
    m = jnp.max(s, axis=-1, keepdims=True)                                 # (TQ, 1)
    p = jnp.exp(s - m)                                                     # (TQ, N)
    l = jnp.sum(p, axis=-1, keepdims=True)                                 # (TQ, 1)
    att = p * pl.reciprocal(l, approx=True)                                # (TQ, N)

    # value projection + attention-weighted aggregation
    v = jnp.dot(w3_ref[...], xf, preferred_element_type=jnp.float32) \
        + b3_ref[...]                                                      # (C, N) f32
    refine = lax.dot_general(v.astype(mm_dtype), att.astype(mm_dtype),
                             (((1,), (1,)), ((), ())),
                             preferred_element_type=jnp.float32)           # (C, TQ)

    gamma = gamma_ref[0]
    o_ref[...] = (gamma * refine + xq_f32).astype(o_ref.dtype)


def _pick_q_tile(n):
    """Largest (8,128)-friendly query tile dividing N, else the whole axis."""
    for cand in (256, 128):
        if n > cand and n % cand == 0:
            return cand
    return n


def sa_module_pallas(x_nchw, w1, b1, w2, b2, w3, b3, gamma, *,
                     matmul_dtype=jnp.bfloat16):
    """x_nchw: (B, C, H, W). Conv weights in PyTorch shape (Cout, Cin, 1, 1)."""
    del b2  # b2 only produces per-row-constant score terms -> cancels in softmax
    B, C, H, W = x_nchw.shape
    N = H * W
    C8 = w1.shape[0]

    # NCHW -> (B, C, N): pure reshape, no transpose / data movement.
    x = x_nchw.reshape(B, C, N)

    w1m = w1.reshape(C8, C).astype(jnp.float32)       # (C8, C)
    w2m = w2.reshape(C8, C).astype(jnp.float32)       # (C8, C)
    w3m = w3.reshape(C, C)                            # (C, C)

    # Fold q/k projections: A^T = W2^T W1 (C, C), u = b1^T W2 (1, C).
    a_t = (w2m.T @ w1m).astype(matmul_dtype)
    u = (b1.astype(jnp.float32) @ w2m).reshape(1, C).astype(matmul_dtype)
    w3c = w3m.astype(matmul_dtype)
    b3c = b3.reshape(C, 1).astype(jnp.float32)
    gamma_s = gamma.reshape(1).astype(jnp.float32)

    tq = _pick_q_tile(N)
    nq = N // tq

    out = pl.pallas_call(
        sa_kernel,
        out_shape=jax.ShapeDtypeStruct((B, C, N), x.dtype),
        grid_spec=pltpu.PrefetchScalarGridSpec(
            num_scalar_prefetch=0,
            grid=(B, nq),
            in_specs=[
                # query tile of x (squeezed batch dim -> kernel sees (C, tq))
                pl.BlockSpec((None, C, tq), lambda b, q: (b, 0, q)),
                # full x for keys/values (re-used across q steps, no re-DMA)
                pl.BlockSpec((None, C, N), lambda b, q: (b, 0, 0)),
                pl.BlockSpec((C, C), lambda b, q: (0, 0)),   # A^T
                pl.BlockSpec((1, C), lambda b, q: (0, 0)),   # u = b1^T W2
                pl.BlockSpec((C, C), lambda b, q: (0, 0)),   # W3
                pl.BlockSpec((C, 1), lambda b, q: (0, 0)),   # b3
                pl.BlockSpec(memory_space=pltpu.MemorySpace.SMEM),  # gamma scalar
            ],
            out_specs=pl.BlockSpec((None, C, tq), lambda b, q: (b, 0, q)),
        ),
        compiler_params=pltpu.CompilerParams(
            dimension_semantics=("parallel", "parallel")),
    )(x, x, a_t, u, w3c, b3c, gamma_s)

    # (B, C, N) -> NCHW: free reshape.
    return out.reshape(B, C, H, W)


def sa_module_ref(x_nchw, w1, b1, w2, b2, w3, b3, gamma):
    """Pure-JAX reference mirroring the PyTorch forward exactly (NCHW)."""
    B, C, H, W = x_nchw.shape
    N = H * W
    C8 = w1.shape[0]
    xf = x_nchw.reshape(B, C, N)                                   # (B, C, N)
    w1m = w1.reshape(C8, C)
    w2m = w2.reshape(C8, C)
    w3m = w3.reshape(C, C)
    q = jnp.einsum('oc,bcn->bon', w1m, xf) + b1[None, :, None]     # (B, C8, N)
    k = jnp.einsum('oc,bcn->bon', w2m, xf) + b2[None, :, None]     # (B, C8, N)
    v = jnp.einsum('oc,bcn->bon', w3m, xf) + b3[None, :, None]     # (B, C, N)
    rel = jnp.einsum('bci,bcj->bij', q, k)                         # (B, N, N)
    att = jax.nn.softmax(rel, axis=-1)
    refine = jnp.einsum('bcj,bij->bci', v, att)                    # (B, C, N)
    out = gamma.reshape(()) * refine.reshape(B, C, H, W) + x_nchw
    return out


if __name__ == "__main__":
    B, C, H, W = 2, 32, 8, 8   # C // 8 = 4

    key = jax.random.PRNGKey(0)
    kx, k1, k2, k3, kb1, kb2, kb3 = jax.random.split(key, 7)

    x = jax.random.normal(kx, (B, C, H, W), dtype=jnp.float32)

    C8 = C // 8
    # Conv weights in PyTorch layout (Cout, Cin, 1, 1); deterministic init.
    w1 = jax.random.normal(k1, (C8, C, 1, 1), dtype=jnp.float32) * 0.1
    w2 = jax.random.normal(k2, (C8, C, 1, 1), dtype=jnp.float32) * 0.1
    w3 = jax.random.normal(k3, (C, C, 1, 1), dtype=jnp.float32) * 0.1
    b1 = jax.random.normal(kb1, (C8,), dtype=jnp.float32) * 0.1
    b2 = jax.random.normal(kb2, (C8,), dtype=jnp.float32) * 0.1
    b3 = jax.random.normal(kb3, (C,), dtype=jnp.float32) * 0.1
    # PyTorch init sets gamma = 0 (output == input); use a nonzero value so the
    # attention path is actually exercised/verified.
    gamma = jnp.array([0.5], dtype=jnp.float32)

    ref = sa_module_ref(x, w1, b1, w2, b2, w3, b3, gamma)

    # f32 matmul operands: tight check of the restructured (folded q.k^T) math.
    out_f32 = sa_module_pallas(x, w1, b1, w2, b2, w3, b3, gamma,
                               matmul_dtype=jnp.float32)
    out_f32 = jax.block_until_ready(out_f32)
    assert out_f32.shape == x.shape
    assert jnp.allclose(out_f32, ref, atol=5e-3, rtol=5e-3), "f32 mismatch vs reference"

    # bf16 matmul operands, f32 accumulation (production default per v6e/v7x MXU
    # feedback) -- looser tolerance per bf16 operand precision.
    out_bf16 = sa_module_pallas(x, w1, b1, w2, b2, w3, b3, gamma)
    out_bf16 = jax.block_until_ready(out_bf16)
    assert out_bf16.shape == x.shape
    assert jnp.allclose(out_bf16, ref, atol=2e-2, rtol=2e-2), "bf16 mismatch vs reference"

    print("KERNEL_OK")
</pallas_src>

<mosaic_0001>
module attributes {stable_mosaic.version = 11 : i64} {
  func.func @sa_kernel(%arg0: i32, %arg1: i32, %arg2: memref<1x32x64xf32, #tpu.memory_space<vmem>>, %arg3: memref<1x32x64xf32, #tpu.memory_space<vmem>>, %arg4: memref<32x32xf32, #tpu.memory_space<vmem>>, %arg5: memref<1x32xf32, #tpu.memory_space<vmem>>, %arg6: memref<32x32xf32, #tpu.memory_space<vmem>>, %arg7: memref<32x1xf32, #tpu.memory_space<vmem>>, %arg8: memref<1xf32, #tpu.memory_space<smem>>, %arg9: memref<1x32x64xf32, #tpu.memory_space<vmem>>) attributes {dimension_semantics = [#tpu.dimension_semantics<parallel>, #tpu.dimension_semantics<parallel>], iteration_bounds = array<i64: 2, 1>, scalar_prefetch = 0 : i64, scratch_operands = 0 : i64, tpu.core_type = #tpu.core_type<tc>, window_params = [{transform_indices = @transform_0, window_bounds = array<i64: 1, 32, 64>}, {transform_indices = @transform_1, window_bounds = array<i64: 1, 32, 64>}, {pipeline_mode = #tpu.pipeline_mode<synchronous>, transform_indices = @transform_2, window_bounds = array<i64: 32, 32>}, {pipeline_mode = #tpu.pipeline_mode<synchronous>, transform_indices = @transform_3, window_bounds = array<i64: 1, 32>}, {pipeline_mode = #tpu.pipeline_mode<synchronous>, transform_indices = @transform_4, window_bounds = array<i64: 32, 32>}, {pipeline_mode = #tpu.pipeline_mode<synchronous>, transform_indices = @transform_5, window_bounds = array<i64: 32, 1>}, {transform_indices = @transform_6, window_bounds = array<i64: 1>}, {transform_indices = @transform_7, window_bounds = array<i64: 1, 32, 64>}]} {
    %c0 = arith.constant 0 : index
    %c0_0 = arith.constant 0 : index
    %c0_1 = arith.constant 0 : index
    %0 = vector.load %arg2[%c0, %c0_0, %c0_1] : memref<1x32x64xf32, #tpu.memory_space<vmem>>, vector<1x32x64xf32>
    %1 = vector.shape_cast %0 : vector<1x32x64xf32> to vector<32x64xf32>
    %c0_2 = arith.constant 0 : index
    %c0_3 = arith.constant 0 : index
    %c0_4 = arith.constant 0 : index
    %2 = vector.load %arg3[%c0_2, %c0_3, %c0_4] : memref<1x32x64xf32, #tpu.memory_space<vmem>>, vector<1x32x64xf32>
    %3 = vector.shape_cast %2 : vector<1x32x64xf32> to vector<32x64xf32>
    %c0_5 = arith.constant 0 : index
    %c0_6 = arith.constant 0 : index
    %4 = vector.load %arg4[%c0_5, %c0_6] : memref<32x32xf32, #tpu.memory_space<vmem>>, vector<32x32xf32>
    %cst = arith.constant dense<0.000000e+00> : vector<32x64xf32>
    %5 = tpu.matmul %4, %1, %cst {dimension_numbers = #tpu.dot_dimension_numbers<[1], [0], [0], [1], [0, 0, 1, 1], [], []>} : vector<32x32xf32>, vector<32x64xf32>, vector<32x64xf32> -> vector<32x64xf32>
    %cst_7 = arith.constant dense<0.000000e+00> : vector<64x64xf32>
    %6 = tpu.matmul %5, %3, %cst_7 {dimension_numbers = #tpu.dot_dimension_numbers<[0], [0], [1], [1], [0, 1, 1, 1], [], []>} : vector<32x64xf32>, vector<32x64xf32>, vector<64x64xf32> -> vector<64x64xf32>
    %c0_8 = arith.constant 0 : index
    %c0_9 = arith.constant 0 : index
    %7 = vector.load %arg5[%c0_8, %c0_9] : memref<1x32xf32, #tpu.memory_space<vmem>>, vector<1x32xf32>
    %cst_10 = arith.constant dense<0.000000e+00> : vector<1x64xf32>
    %8 = tpu.matmul %7, %3, %cst_10 {dimension_numbers = #tpu.dot_dimension_numbers<[1], [0], [0], [1], [0, 0, 1, 1], [], []>} : vector<1x32xf32>, vector<32x64xf32>, vector<1x64xf32> -> vector<1x64xf32>
    %9 = vector.broadcast %8 : vector<1x64xf32> to vector<64x64xf32>
    %10 = arith.addf %6, %9 : vector<64x64xf32>
    %cst_11 = arith.constant dense<0xFF800000> : vector<64xf32>
    %11 = vector.multi_reduction <maximumf>, %10, %cst_11 [1] : vector<64x64xf32> to vector<64xf32>
    %12 = vector.shape_cast %11 : vector<64xf32> to vector<64x1xf32>
    %13 = vector.broadcast %12 : vector<64x1xf32> to vector<64x64xf32>
    %14 = arith.subf %10, %13 : vector<64x64xf32>
    %15 = math.exp %14 : vector<64x64xf32>
    %cst_12 = arith.constant dense<0.000000e+00> : vector<64xf32>
    %16 = vector.multi_reduction <add>, %15, %cst_12 [1] : vector<64x64xf32> to vector<64xf32>
    %17 = vector.shape_cast %16 : vector<64xf32> to vector<64x1xf32>
    %18 = tpu.reciprocal %17 {approx = true} : vector<64x1xf32> -> vector<64x1xf32>
    %19 = vector.broadcast %18 : vector<64x1xf32> to vector<64x64xf32>
    %20 = arith.mulf %15, %19 : vector<64x64xf32>
    %c0_13 = arith.constant 0 : index
    %c0_14 = arith.constant 0 : index
    %21 = vector.load %arg6[%c0_13, %c0_14] : memref<32x32xf32, #tpu.memory_space<vmem>>, vector<32x32xf32>
    %cst_15 = arith.constant dense<0.000000e+00> : vector<32x64xf32>
    %22 = tpu.matmul %21, %3, %cst_15 {dimension_numbers = #tpu.dot_dimension_numbers<[1], [0], [0], [1], [0, 0, 1, 1], [], []>} : vector<32x32xf32>, vector<32x64xf32>, vector<32x64xf32> -> vector<32x64xf32>
    %c0_16 = arith.constant 0 : index
    %c0_17 = arith.constant 0 : index
    %23 = vector.load %arg7[%c0_16, %c0_17] : memref<32x1xf32, #tpu.memory_space<vmem>>, vector<32x1xf32>
    %24 = vector.broadcast %23 : vector<32x1xf32> to vector<32x64xf32>
    %25 = arith.addf %22, %24 : vector<32x64xf32>
    %cst_18 = arith.constant dense<0.000000e+00> : vector<32x64xf32>
    %26 = tpu.matmul %25, %20, %cst_18 {dimension_numbers = #tpu.dot_dimension_numbers<[1], [1], [0], [0], [0, 0, 1, 0], [], []>} : vector<32x64xf32>, vector<64x64xf32>, vector<32x64xf32> -> vector<32x64xf32>
    %c0_19 = arith.constant 0 : index
    %27 = memref.load %arg8[%c0_19] : memref<1xf32, #tpu.memory_space<smem>>
    %28 = vector.broadcast %27 : f32 to vector<32x64xf32>
    %29 = arith.mulf %28, %26 : vector<32x64xf32>
    %30 = arith.addf %29, %1 : vector<32x64xf32>
    %c0_20 = arith.constant 0 : index
    %c0_21 = arith.constant 0 : index
    %c0_22 = arith.constant 0 : index
    %31 = vector.load %arg9[%c0_20, %c0_21, %c0_22] : memref<1x32x64xf32, #tpu.memory_space<vmem>>, vector<1x32x64xf32>
    %32 = vector.shape_cast %31 : vector<1x32x64xf32> to vector<32x64xf32>
    %33 = vector.shape_cast %30 : vector<32x64xf32> to vector<1x32x64xf32>
    tpu.vector_store %arg9[%c0_20, %c0_21, %c0_22], %33 {strides = array<i32>} : memref<1x32x64xf32, #tpu.memory_space<vmem>>, vector<1x32x64xf32>,
    return
  }
  func.func @transform_0(%arg0: i32, %arg1: i32) -> (i32, i32, i32) {
    %c0_i32 = arith.constant 0 : i32
    %c0_i32_0 = arith.constant 0 : i32
    return %arg0, %c0_i32, %arg1 : i32, i32, i32
  }
  func.func @transform_1(%arg0: i32, %arg1: i32) -> (i32, i32, i32) {
    %c0_i32 = arith.constant 0 : i32
    %c0_i32_0 = arith.constant 0 : i32
    %c0_i32_1 = arith.constant 0 : i32
    return %arg0, %c0_i32, %c0_i32_0 : i32, i32, i32
  }
  func.func @transform_2(%arg0: i32, %arg1: i32) -> (i32, i32) {
    %c0_i32 = arith.constant 0 : i32
    %c0_i32_0 = arith.constant 0 : i32
    %c0_i32_1 = arith.constant 0 : i32
    return %c0_i32, %c0_i32_0 : i32, i32
  }
  func.func @transform_3(%arg0: i32, %arg1: i32) -> (i32, i32) {
    %c0_i32 = arith.constant 0 : i32
    %c0_i32_0 = arith.constant 0 : i32
    %c0_i32_1 = arith.constant 0 : i32
    return %c0_i32, %c0_i32_0 : i32, i32
  }
  func.func @transform_4(%arg0: i32, %arg1: i32) -> (i32, i32) {
    %c0_i32 = arith.constant 0 : i32
    %c0_i32_0 = arith.constant 0 : i32
    %c0_i32_1 = arith.constant 0 : i32
    return %c0_i32, %c0_i32_0 : i32, i32
  }
  func.func @transform_5(%arg0: i32, %arg1: i32) -> (i32, i32) {
    %c0_i32 = arith.constant 0 : i32
    %c0_i32_0 = arith.constant 0 : i32
    %c0_i32_1 = arith.constant 0 : i32
    return %c0_i32, %c0_i32_0 : i32, i32
  }
  func.func @transform_6(%arg0: i32, %arg1: i32) -> i32 {
    %c0_i32 = arith.constant 0 : i32
    %c0_i32_0 = arith.constant 0 : i32
    return %c0_i32 : i32
  }
  func.func @transform_7(%arg0: i32, %arg1: i32) -> (i32, i32, i32) {
    %c0_i32 = arith.constant 0 : i32
    %c0_i32_0 = arith.constant 0 : i32
    return %arg0, %c0_i32, %arg1 : i32, i32, i32
  }
}

</mosaic_0001>

<llo_original>
// kernel: tpu_custom_call.1
$region0: #{tpu_custom_call.1}
  #allocation0 [shape = 'u32[]', space=smem, size = 0x4, offset = 0x4, fixed_abs, tag = 'smem constant byte address 0x4 - core index']
  #allocation1 [shape = 'u32[72,128]{1,0:T(1,128)}', space=vmem, size = 0x9000, scoped, tag = 'internal scratch']
  #allocation2 [shape = 'f32[1]{0:T(128)S(6)}', space=smem, size = 0x200, scoped, tag = 'scoped memory for tpu_custom_call.1']
  %s0 = inlined_call_operand.hbm [shape: f32[2,32,64], index: 0, kind: input, shape index: {}]
  %s1 = inlined_call_operand.hbm [shape: f32[2,32,64], index: 1, kind: input, shape index: {}]
  %s2 = inlined_call_operand.vmem [shape: f32[32,32], index: 2, kind: input, shape index: {}]
  %s3 = inlined_call_operand.vmem [shape: f32[1,32], index: 3, kind: input, shape index: {}]
  %s4 = inlined_call_operand.hbm [shape: f32[32,32], index: 4, kind: input, shape index: {}]
  %s5 = inlined_call_operand.vmem [shape: f32[32,1], index: 5, kind: input, shape index: {}]
  %s6 = inlined_call_operand.<no memory space> [shape: f32[1], index: 6, kind: input, shape index: {}]
  %s7 = inlined_call_operand.hbm [shape: f32[2,32,64], index: 7, kind: output, shape index: {}]
  %s8 = sld [smem:[#allocation0]]
  $region73: #{tpu_custom_call.1} parent=0
    _
  %s10 = ssub.s32 1, %s8
  %s11 = scalar_select 0, %s10, %s8
  %12 = sst [smem:[#allocation2]] %s6
  $region1: #{tpu_custom_call.1} parent=0
    #allocation3 [shape = 'u8[32768]{0}', space=vmem, size = 0x8000, scoped, tag = 'input window, operand 0']
    #allocation4 [shape = 's32[2]{0}', space=sflag, size = 0x8, scoped, tag = 'scoped memory for tpu_custom_call.1']
    #allocation5 [shape = 's32[2]{0}', space=sflag, size = 0x8, scoped, tag = 'scoped memory for tpu_custom_call.1']
    #allocation6 [shape = 'u8[32768]{0}', space=vmem, size = 0x8000, scoped, tag = 'input window, operand 1']
    #allocation7 [shape = 's32[2]{0}', space=sflag, size = 0x8, scoped, tag = 'scoped memory for tpu_custom_call.1']
    #allocation8 [shape = 'u8[16384]{0}', space=vmem, size = 0x4000, scoped, tag = 'input window, operand 4, single buffered']
    #allocation9 [shape = 'u8[32768]{0}', space=vmem, size = 0x8000, scoped, tag = 'output window, operand 0']
    %13 = vsyncpa [#allocation4], 0
    %s14 = scalar_lea.sflag [#allocation4], 1
    %15 = vsyncpa %s14, 0
    %16 = vsyncpa [#allocation7], 0
    %s17 = scalar_lea.sflag [#allocation7], 1
    %18 = vsyncpa %s17, 0
    %19 = vsyncpa [#allocation5], 0
    %s20 = scalar_lea.sflag [#allocation5], 1
    %21 = vsyncpa %s20, 0
    loop: start=0, step=1, limit=4
    $region2: #{tpu_custom_call.1} parent=1 // loop_pre_header
      _
    $region3: #{tpu_custom_call.1} parent=1 // loop_header
      %s23 = sphi 0, %s27
      %p24 = scmp.ge.s32.totalorder %s23, 4
      %s30 = sphi 0, %s42
      %s31 = sphi 0, %s38
      %s32 = sphi 0, %s30
      %s33 = sphi 0, %s31
      %s34 = sphi 0, %s32
      %s35 = sphi 0, %s33
      %s47 = sphi 0, %s49
      %s50 = sphi 0, %s47
      %s51 = sphi 0, %s50
      %s67 = sphi 0, %s51
      %s73 = sphi 0, %s75
      %s76 = sphi 0, %s73
      %s77 = sphi 0, %s76
      %s93 = sphi 0, %s77
      %s97 = sphi 0, %s97
      %s99 = sphi 0, %s97
      %s100 = sphi 0, %s99
      %s114 = sphi 0, %s100
      %s118 = sphi 0, %s118
      %s120 = sphi 0, %s118
      %s121 = sphi 0, %s120
      %s135 = sphi 0, %s121
      %s139 = sphi 0, %s139
      %s141 = sphi 0, %s139
      %s142 = sphi 0, %s141
      %s156 = sphi 0, %s142
      %s160 = sphi 0, %s160
      %s162 = sphi 0, %s160
      %s163 = sphi 0, %s162
      %s177 = sphi 0, %s163
      %s181 = sphi 0, %s181
      %s183 = sphi 0, %s181
      %s184 = sphi 0, %s183
      %s198 = sphi 0, %s184
      %s206 = sphi 0, %s208
      %s209 = sphi 0, %s206
      %s210 = sphi 0, %s209
      %s226 = sphi 0, %s210
    $region4: #{tpu_custom_call.1} parent=1 // loop_header_branch
      %26 = sbr.rel (%p24) target = $region8
    $region5: #{tpu_custom_call.1} parent=1 // loop_body
      %s28 = ssub.s32 %s23, 1
      %s29 = ssub.s32 %s23, 2
      %s36 = sadd.s32 1, %s31
      %p37 = scmp.ge.s32.totalorder %s36, 1
      %s38 = scalar_select %p37, 0, %s36
      %s39 = sadd.s32 1, %s30
      %s40 = scalar_select %p37, %s39, %s30
      %p41 = scmp.ge.s32.totalorder %s40, 2
      %s42 = scalar_select %p41, 0, %s40
      %s43 = ssub.s32 %s30, %s42
      %s44 = ssub.s32 %s31, %s38
      %s45 = sor.u32 %s43, %s44
      %p46 = scmp.eq.s32.totalorder %s45, 0
      %s48 = sadd.s32 %s47, 1
      %s49 = scalar_select %p46, %s47, %s48
      %p52 = pneg %p46
      %p53 = scmp.eq.s32.totalorder %s23, 1
      %p54 = por %p52, %p53
      %p55 = scmp.ne.s32.totalorder %s47, %s50
      %p56 = scmp.eq.s32.totalorder %s23, 0
      %p57 = por %p55, %p56
      %p58 = scmp.ne.s32.totalorder %s47, %s50
      %p59 = scmp.eq.s32.totalorder %s28, 1
      %p60 = por %p58, %p59
      %p61 = scmp.ne.s32.totalorder %s50, %s51
      %p62 = scmp.eq.s32.totalorder %s28, 0
      %p63 = por %p61, %p62
      %p64 = scmp.ne.s32.totalorder %s50, %s51
      %p65 = scmp.eq.s32.totalorder %s29, 1
      %p66 = por %p64, %p65
      %p68 = scmp.ne.s32.totalorder %s51, %s67
      %p69 = scmp.eq.s32.totalorder %s29, 0
      %p70 = por %p68, %p69
      %s71 = ssub.s32 %s30, %s42
      %p72 = scmp.eq.s32.totalorder %s71, 0
      %s74 = sadd.s32 %s73, 1
      %s75 = scalar_select %p72, %s73, %s74
      %p78 = pneg %p72
      %p79 = scmp.eq.s32.totalorder %s23, 1
      %p80 = por %p78, %p79
      %p81 = scmp.ne.s32.totalorder %s73, %s76
      %p82 = scmp.eq.s32.totalorder %s23, 0
      %p83 = por %p81, %p82
      %p84 = scmp.ne.s32.totalorder %s73, %s76
      %p85 = scmp.eq.s32.totalorder %s28, 1
      %p86 = por %p84, %p85
      %p87 = scmp.ne.s32.totalorder %s76, %s77
      %p88 = scmp.eq.s32.totalorder %s28, 0
      %p89 = por %p87, %p88
      %p90 = scmp.ne.s32.totalorder %s76, %s77
      %p91 = scmp.eq.s32.totalorder %s29, 1
      %p92 = por %p90, %p91
      %p94 = scmp.ne.s32.totalorder %s77, %s93
      %p95 = scmp.eq.s32.totalorder %s29, 0
      %p96 = por %p94, %p95
      %s98 = sadd.s32 %s97, 1
      %p101 = scmp.eq.s32.totalorder %s23, 1
      %p102 = scmp.ne.s32.totalorder %s97, %s99
      %p103 = scmp.eq.s32.totalorder %s23, 0
      %p104 = por %p102, %p103
      %p105 = scmp.ne.s32.totalorder %s97, %s99
      %p106 = scmp.eq.s32.totalorder %s28, 1
      %p107 = por %p105, %p106
      %p108 = scmp.ne.s32.totalorder %s99, %s100
      %p109 = scmp.eq.s32.totalorder %s28, 0
      %p110 = por %p108, %p109
      %p111 = scmp.ne.s32.totalorder %s99, %s100
      %p112 = scmp.eq.s32.totalorder %s29, 1
      %p113 = por %p111, %p112
      %p115 = scmp.ne.s32.totalorder %s100, %s114
      %p116 = scmp.eq.s32.totalorder %s29, 0
      %p117 = por %p115, %p116
      %s119 = sadd.s32 %s118, 1
      %p122 = scmp.eq.s32.totalorder %s23, 1
      %p123 = scmp.ne.s32.totalorder %s118, %s120
      %p124 = scmp.eq.s32.totalorder %s23, 0
      %p125 = por %p123, %p124
      %p126 = scmp.ne.s32.totalorder %s118, %s120
      %p127 = scmp.eq.s32.totalorder %s28, 1
      %p128 = por %p126, %p127
      %p129 = scmp.ne.s32.totalorder %s120, %s121
      %p130 = scmp.eq.s32.totalorder %s28, 0
      %p131 = por %p129, %p130
      %p132 = scmp.ne.s32.totalorder %s120, %s121
      %p133 = scmp.eq.s32.totalorder %s29, 1
      %p134 = por %p132, %p133
      %p136 = scmp.ne.s32.totalorder %s121, %s135
      %p137 = scmp.eq.s32.totalorder %s29, 0
      %p138 = por %p136, %p137
      %s140 = sadd.s32 %s139, 1
      %p143 = scmp.eq.s32.totalorder %s23, 1
      %p144 = scmp.ne.s32.totalorder %s139, %s141
      %p145 = scmp.eq.s32.totalorder %s23, 0
      %p146 = por %p144, %p145
      %p147 = scmp.ne.s32.totalorder %s139, %s141
      %p148 = scmp.eq.s32.totalorder %s28, 1
      %p149 = por %p147, %p148
      %p150 = scmp.ne.s32.totalorder %s141, %s142
      %p151 = scmp.eq.s32.totalorder %s28, 0
      %p152 = por %p150, %p151
      %p153 = scmp.ne.s32.totalorder %s141, %s142
      %p154 = scmp.eq.s32.totalorder %s29, 1
      %p155 = por %p153, %p154
      %p157 = scmp.ne.s32.totalorder %s142, %s156
      %p158 = scmp.eq.s32.totalorder %s29, 0
      %p159 = por %p157, %p158
      %s161 = sadd.s32 %s160, 1
      %p164 = scmp.eq.s32.totalorder %s23, 1
      %p165 = scmp.ne.s32.totalorder %s160, %s162
      %p166 = scmp.eq.s32.totalorder %s23, 0
      %p167 = por %p165, %p166
      %p168 = scmp.ne.s32.totalorder %s160, %s162
      %p169 = scmp.eq.s32.totalorder %s28, 1
      %p170 = por %p168, %p169
      %p171 = scmp.ne.s32.totalorder %s162, %s163
      %p172 = scmp.eq.s32.totalorder %s28, 0
      %p173 = por %p171, %p172
      %p174 = scmp.ne.s32.totalorder %s162, %s163
      %p175 = scmp.eq.s32.totalorder %s29, 1
      %p176 = por %p174, %p175
      %p178 = scmp.ne.s32.totalorder %s163, %s177
      %p179 = scmp.eq.s32.totalorder %s29, 0
      %p180 = por %p178, %p179
      %s182 = sadd.s32 %s181, 1
      %p185 = scmp.eq.s32.totalorder %s23, 1
      %p186 = scmp.ne.s32.totalorder %s181, %s183
      %p187 = scmp.eq.s32.totalorder %s23, 0
      %p188 = por %p186, %p187
      %p189 = scmp.ne.s32.totalorder %s181, %s183
      %p190 = scmp.eq.s32.totalorder %s28, 1
      %p191 = por %p189, %p190
      %p192 = scmp.ne.s32.totalorder %s183, %s184
      %p193 = scmp.eq.s32.totalorder %s28, 0
      %p194 = por %p192, %p193
      %p195 = scmp.ne.s32.totalorder %s183, %s184
      %p196 = scmp.eq.s32.totalorder %s29, 1
      %p197 = por %p195, %p196
      %p199 = scmp.ne.s32.totalorder %s184, %s198
      %p200 = scmp.eq.s32.totalorder %s29, 0
      %p201 = por %p199, %p200
      %s202 = ssub.s32 %s30, %s42
      %s203 = ssub.s32 %s31, %s38
      %s204 = sor.u32 %s202, %s203
      %p205 = scmp.eq.s32.totalorder %s204, 0
      %s207 = sadd.s32 %s206, 1
      %s208 = scalar_select %p205, %s206, %s207
      %p211 = pneg %p205
      %p212 = scmp.eq.s32.totalorder %s23, 1
      %p213 = por %p211, %p212
      %p214 = scmp.ne.s32.totalorder %s206, %s209
      %p215 = scmp.eq.s32.totalorder %s23, 0
      %p216 = por %p214, %p215
      %p217 = scmp.ne.s32.totalorder %s206, %s209
      %p218 = scmp.eq.s32.totalorder %s28, 1
      %p219 = por %p217, %p218
      %p220 = scmp.ne.s32.totalorder %s209, %s210
      %p221 = scmp.eq.s32.totalorder %s28, 0
      %p222 = por %p220, %p221
      %p223 = scmp.ne.s32.totalorder %s209, %s210
      %p224 = scmp.eq.s32.totalorder %s29, 1
      %p225 = por %p223, %p224
      %p227 = scmp.ne.s32.totalorder %s210, %s226
      %p228 = scmp.eq.s32.totalorder %s29, 0
      %p229 = por %p227, %p228
      %p230 = scmp.le.s32.totalorder 1, %s23
      %p231 = scmp.lt.s32.totalorder %s23, 3
      %p232 = pnand %p230, %p231
      %p233 = pneg %p232
      // Predicated region
      $region9: #{tpu_custom_call.1} parent=5 // pred_check
        _
      $region10: #{tpu_custom_call.1} parent=5 // pred_check_branch
        %235 = sbr.rel (%p232) target = $region12
      $region11: #{tpu_custom_call.1} parent=5 // pred_region
        %s236 = ssub.s32 %s23, 1
        // Predicated region
        $region13: #{tpu_custom_call.1} parent=11 // pred_check
          %p237 = pneg %p110
        $region14: #{tpu_custom_call.1} parent=11 // pred_check_branch
          %239 = sbr.rel (%p237) target = $region16
        $region15: #{tpu_custom_call.1} parent=11 // pred_region
          _
        $region16: #{tpu_custom_call.1} parent=11 // pred_fallthru
          _
        // Predicated region
        $region17: #{tpu_custom_call.1} parent=11 // pred_check
          %p240 = pneg %p131
        $region18: #{tpu_custom_call.1} parent=11 // pred_check_branch
          %242 = sbr.rel (%p240) target = $region20
        $region19: #{tpu_custom_call.1} parent=11 // pred_region
          _
        $region20: #{tpu_custom_call.1} parent=11 // pred_fallthru
          _
        // Predicated region
        $region21: #{tpu_custom_call.1} parent=11 // pred_check
          %p243 = pneg %p152
        $region22: #{tpu_custom_call.1} parent=11 // pred_check_branch
          %245 = sbr.rel (%p243) target = $region24
        $region23: #{tpu_custom_call.1} parent=11 // pred_region
          %247 = vsyncadd [#allocation7], 0
          %s248 = sshll.u32 %s4, 4
          %s249 = int_to_ptr.hbm [resolvable:$true] %s248
          %s250 = sshll.u32 [#allocation8], 4
          %s251 = int_to_ptr.vmem [resolvable:$true] %s250
          %256 = dma.hbm_to_vmem [thread:$0]  %s249, 512, %s251, [#allocation7], 128, 128, 8
        $region24: #{tpu_custom_call.1} parent=11 // pred_fallthru
          _
        // Predicated region
        $region25: #{tpu_custom_call.1} parent=11 // pred_check
          %p257 = pneg %p173
        $region26: #{tpu_custom_call.1} parent=11 // pred_check_branch
          %259 = sbr.rel (%p257) target = $region28
        $region27: #{tpu_custom_call.1} parent=11 // pred_region
          _
        $region28: #{tpu_custom_call.1} parent=11 // pred_fallthru
          _
        // Predicated region
        $region29: #{tpu_custom_call.1} parent=11 // pred_check
          %p260 = pneg %p194
        $region30: #{tpu_custom_call.1} parent=11 // pred_check_branch
          %262 = sbr.rel (%p260) target = $region32
        $region31: #{tpu_custom_call.1} parent=11 // pred_region
          _
        $region32: #{tpu_custom_call.1} parent=11 // pred_fallthru
          _
      $region12: #{tpu_custom_call.1} parent=5 // pred_fallthru
        _
      %p263 = scmp.lt.s32.totalorder %s23, 2
      // Predicated region
      $region33: #{tpu_custom_call.1} parent=5 // pred_check
        %p264 = pneg %p263
      $region34: #{tpu_custom_call.1} parent=5 // pred_check_branch
        %266 = sbr.rel (%p264) target = $region36
      $region35: #{tpu_custom_call.1} parent=5 // pred_region
        // Predicated region
        $region37: #{tpu_custom_call.1} parent=35 // pred_check
          %p267 = pneg %p57
        $region38: #{tpu_custom_call.1} parent=35 // pred_check_branch
          %269 = sbr.rel (%p267) target = $region40
        $region39: #{tpu_custom_call.1} parent=35 // pred_region
          %s270 = sand.u32 %s47, 1
          %s271 = scalar_lea.sflag [#allocation4], %s270
          %s272 = sand.u32 %s47, 1
          %s273 = smul.addr %s272, 32
          %s274 = scalar_lea.vmem [#allocation3], %s273
          %276 = vsyncadd %s271, 0
          %s277 = smul.addr %s30, 4
          %s278 = sadd.s32 %s31, %s277
          %s279 = smul.addr %s278, 8
          %s280 = scalar_lea.hbm %s0, %s279
          %s281 = sshll.u32 %s280, 4
          %s282 = int_to_ptr.hbm [resolvable:$true] %s281
          %s283 = sshll.u32 %s274, 4
          %s284 = int_to_ptr.vmem [resolvable:$true] %s283
          %289 = dma.hbm_to_vmem [thread:$0]  %s282, 512, %s284, %s271, 128, 128, 8
        $region40: #{tpu_custom_call.1} parent=35 // pred_fallthru
          _
        // Predicated region
        $region41: #{tpu_custom_call.1} parent=35 // pred_check
          %p290 = pneg %p83
        $region42: #{tpu_custom_call.1} parent=35 // pred_check_branch
          %292 = sbr.rel (%p290) target = $region44
        $region43: #{tpu_custom_call.1} parent=35 // pred_region
          %s293 = sand.u32 %s23, 1
          %s294 = scalar_lea.sflag [#allocation7], %s293
          %s295 = sand.u32 %s73, 1
          %s296 = smul.addr %s295, 32
          %s297 = scalar_lea.vmem [#allocation6], %s296
          %299 = vsyncadd %s294, 0
          %s300 = smul.addr %s30, 4
          %s301 = smul.addr %s300, 8
          %s302 = scalar_lea.hbm %s1, %s301
          %s303 = sshll.u32 %s302, 4
          %s304 = int_to_ptr.hbm [resolvable:$true] %s303
          %s305 = sshll.u32 %s297, 4
          %s306 = int_to_ptr.vmem [resolvable:$true] %s305
          %311 = dma.hbm_to_vmem [thread:$0]  %s304, 512, %s306, %s294, 128, 128, 8
        $region44: #{tpu_custom_call.1} parent=35 // pred_fallthru
          _
      $region36: #{tpu_custom_call.1} parent=5 // pred_fallthru
        _
      %p312 = scmp.le.s32.totalorder 1, %s23
      %p313 = scmp.lt.s32.totalorder %s23, 3
      %p314 = pnand %p312, %p313
      %p315 = pneg %p314
      // Predicated region
      $region45: #{tpu_custom_call.1} parent=5 // pred_check
        _
      $region46: #{tpu_custom_call.1} parent=5 // pred_check_branch
        %317 = sbr.rel (%p314) target = $region48
      $region47: #{tpu_custom_call.1} parent=5 // pred_region
        %s318 = ssub.s32 %s23, 1
        %s319 = sand.u32 %s50, 1
        %s320 = scalar_lea.sflag [#allocation4], %s319
        %s321 = sand.u32 %s50, 1
        %s322 = smul.addr %s321, 32
        %s323 = scalar_lea.vmem [#allocation3], %s322
        // Predicated region
        $region49: #{tpu_custom_call.1} parent=47 // pred_check
          %p324 = pneg %p63
        $region50: #{tpu_custom_call.1} parent=47 // pred_check_branch
          %326 = sbr.rel (%p324) target = $region52
        $region51: #{tpu_custom_call.1} parent=47 // pred_region
          %328 = dma.done %s320, 512
        $region52: #{tpu_custom_call.1} parent=47 // pred_fallthru
          _
        %s329 = sand.u32 %s28, 1
        %s330 = scalar_lea.sflag [#allocation7], %s329
        %s331 = sand.u32 %s76, 1
        %s332 = smul.addr %s331, 32
        %s333 = scalar_lea.vmem [#allocation6], %s332
        // Predicated region
        $region53: #{tpu_custom_call.1} parent=47 // pred_check
          %p334 = pneg %p89
        $region54: #{tpu_custom_call.1} parent=47 // pred_check_branch
          %336 = sbr.rel (%p334) target = $region56
        $region55: #{tpu_custom_call.1} parent=47 // pred_region
          %338 = dma.done %s330, 512
        $region56: #{tpu_custom_call.1} parent=47 // pred_fallthru
          _
        // Predicated region
        $region57: #{tpu_custom_call.1} parent=47 // pred_check
          %p339 = pneg %p152
        $region58: #{tpu_custom_call.1} parent=47 // pred_check_branch
          %341 = sbr.rel (%p339) target = $region60
        $region59: #{tpu_custom_call.1} parent=47 // pred_region
          %343 = dma.done [#allocation7], 512
        $region60: #{tpu_custom_call.1} parent=47 // pred_fallthru
          _
        %s344 = sand.u32 %s50, 1
        %s345 = scalar_lea.sflag [#allocation4], %s344
        %s346 = sand.u32 %s50, 1
        %s347 = smul.addr %s346, 32
        %s348 = scalar_lea.vmem [#allocation3], %s347
        %p349 = pneg %p63
        %p350 = pneg %p60
        %s351 = sand.u32 %s28, 1
        %s352 = scalar_lea.sflag [#allocation7], %s351
        %s353 = sand.u32 %s76, 1
        %s354 = smul.addr %s353, 32
        %s355 = scalar_lea.vmem [#allocation6], %s354
        %p356 = pneg %p89
        %p357 = pneg %p86
        %p358 = pneg %p110
        %p359 = pneg %p107
        %p360 = pneg %p131
        %p361 = pneg %p128
        %p362 = pneg %p152
        %p363 = pneg %p149
        %p364 = pneg %p173
        %p365 = pneg %p170
        %p366 = pneg %p194
        %p367 = pneg %p191
        %p368 = pneg %p222
        %p369 = pneg %p219
        %s370 = sand.u32 %s209, 1
        %s371 = scalar_lea.sflag [#allocation5], %s370
        %s372 = sand.u32 %s209, 1
        %s373 = smul.addr %s372, 32
        %s374 = scalar_lea.vmem [#allocation9], %s373
        %v375 = vld [vmem:[%s323] sm:$0xff]
        %v376 = vld [vmem:[%s323 + $0x8] sm:$0xff]
        %v377 = vld [vmem:[%s323 + $0x10] sm:$0xff]
        %v378 = vld [vmem:[%s323 + $0x18] sm:$0xff]
        %v379 = vld [vmem:[%s333] sm:$0xff]
        %v380 = vld [vmem:[%s333 + $0x8] sm:$0xff]
        %v381 = vld [vmem:[%s333 + $0x10] sm:$0xff]
        %v382 = vld [vmem:[%s333 + $0x18] sm:$0xff]
        %v383 = vld [vmem:[%s2] sm:$0xff]
        %v384 = vld [vmem:[%s2 + $0x8] sm:$0xff]
        %v385 = vld [vmem:[%s2 + $0x10] sm:$0xff]
        %v386 = vld [vmem:[%s2 + $0x18] sm:$0xff]
        %vm387 = vcmask 261120
        %v389 = vsel %vm387, %v383, 0
        %v392 = vsel %vm387, %v384, 0
        %v395 = vsel %vm387, %v385, 0
        %v398 = vsel %vm387, %v386, 0
        %400 = vmatpush.msra.mxu0 0.0
        %401 = vmatpush.msra.mxu0 0.0
        %402 = vmatpush.msra.mxu0 0.0
        %403 = vmatpush.msra.mxu0 0.0
        %404 = vmatpush.msra.mxu0 0.0
        %405 = vmatpush.msra.mxu0 0.0
        %406 = vmatpush.msra.mxu0 0.0
        %407 = vmatpush.msra.mxu0 0.0
        %408 = vmatpush.msra.mxu0 0.0
        %409 = vmatpush.msra.mxu0 0.0
        %410 = vmatpush.msra.mxu0 0.0
        %411 = vmatpush.msra.mxu0 0.0
        %412 = vmatpush.msra.mxu0 %v378
        %413 = vmatpush.msra.mxu0 %v377
        %414 = vmatpush.msra.mxu0 %v376
        %415 = vmatpush.msra.mxu0 %v375
        %416 = vmatmul.f32.gmra.mxu0 %v389
        %v417 = vpop.f32.mrf.mxu0
        %v418 = vadd.f32 0.0, %v417
        %419 = vmatmul.f32.gmra.mxu0 %v392
        %v420 = vpop.f32.mrf.mxu0
        %v421 = vadd.f32 0.0, %v420
        %422 = vmatmul.f32.gmra.mxu0 %v395
        %v423 = vpop.f32.mrf.mxu0
        %v424 = vadd.f32 0.0, %v423
        %425 = vmatmul.f32.gmra.mxu0 %v398
        %v426 = vpop.f32.mrf.mxu0
        %v427 = vadd.f32 0.0, %v426
        %428 = vdwg.mxu0
        %v429 = vld [vmem:[%s3] sm:$0x1]
        %v431 = vsel %vm387, %v429, 0
        %433 = vmatpush.msra.mxu0 0.0
        %434 = vmatpush.msra.mxu0 0.0
        %435 = vmatpush.msra.mxu0 0.0
        %436 = vmatpush.msra.mxu0 0.0
        %437 = vmatpush.msra.mxu0 0.0
        %438 = vmatpush.msra.mxu0 0.0
        %439 = vmatpush.msra.mxu0 0.0
        %440 = vmatpush.msra.mxu0 0.0
        %441 = vmatpush.msra.mxu0 0.0
        %442 = vmatpush.msra.mxu0 0.0
        %443 = vmatpush.msra.mxu0 0.0
        %444 = vmatpush.msra.mxu0 0.0
        %445 = vmatpush.msra.mxu0 %v382
        %446 = vmatpush.msra.mxu0 %v381
        %447 = vmatpush.msra.mxu0 %v380
        %448 = vmatpush.msra.mxu0 %v379
        %449 = vmatmul.f32.gmra.mxu0 %v431
        %v450 = vpop.f32.mrf.mxu0
        %v451 = vadd.f32 0.0, %v450
        %452 = vdwg.mxu0
        %v453 = vperm.slane %v451, 0
        %454 = vxpose.xlu0.b32.start [1/16] %v418, 128
        %455 = vxpose.xlu0.b32.cont [2/16] %v421, 128
        %456 = vxpose.xlu0.b32.cont [3/16] %v424, 128
        %457 = vxpose.xlu0.b32.cont [4/16] %v427, 128
        %458 = vxpose.xlu0.b32.cont [5/16] 0.0, 128
        %459 = vxpose.xlu0.b32.cont [6/16] 0.0, 128
        %460 = vxpose.xlu0.b32.cont [7/16] 0.0, 128
        %461 = vxpose.xlu0.b32.cont [8/16] 0.0, 128
        %462 = vxpose.xlu0.b32.cont [9/16] 0.0, 128
        %463 = vxpose.xlu0.b32.cont [10/16] 0.0, 128
        %464 = vxpose.xlu0.b32.cont [11/16] 0.0, 128
        %465 = vxpose.xlu0.b32.cont [12/16] 0.0, 128
        %466 = vxpose.xlu0.b32.cont [13/16] 0.0, 128
        %467 = vxpose.xlu0.b32.cont [14/16] 0.0, 128
        %468 = vxpose.xlu0.b32.cont [15/16] 0.0, 128
        %469 = vxpose.xlu0.b32.end [16/16] 0.0, 128
        %v470 = vpop.trf.xlu0
        %v471 = vpop.trf.xlu0
        %v472 = vpop.trf.xlu0
        %v473 = vpop.trf.xlu0
        %v474 = vpop.trf.xlu0
        %v475 = vpop.trf.xlu0
        %v476 = vpop.trf.xlu0
        %v477 = vpop.trf.xlu0
        %v478 = vpop.trf.xlu0
        %v479 = vpop.trf.xlu0
        %v480 = vpop.trf.xlu0
        %v481 = vpop.trf.xlu0
        %v482 = vpop.trf.xlu0
        %v483 = vpop.trf.xlu0
        %v484 = vpop.trf.xlu0
        %v485 = vpop.trf.xlu0
        %v487 = vsel %vm387, %v470, 0
        %v490 = vsel %vm387, %v471, 0
        %v493 = vsel %vm387, %v472, 0
        %v496 = vsel %vm387, %v473, 0
        %v499 = vsel %vm387, %v474, 0
        %v502 = vsel %vm387, %v475, 0
        %v505 = vsel %vm387, %v476, 0
        %v508 = vsel %vm387, %v477, 0
        %510 = vmatpush.msra.mxu0 0.0
        %511 = vmatpush.msra.mxu0 0.0
        %512 = vmatpush.msra.mxu0 0.0
        %513 = vmatpush.msra.mxu0 0.0
        %514 = vmatpush.msra.mxu0 0.0
        %515 = vmatpush.msra.mxu0 0.0
        %516 = vmatpush.msra.mxu0 0.0
        %517 = vmatpush.msra.mxu0 0.0
        %518 = vmatpush.msra.mxu0 0.0
        %519 = vmatpush.msra.mxu0 0.0
        %520 = vmatpush.msra.mxu0 0.0
        %521 = vmatpush.msra.mxu0 0.0
        %522 = vmatpush.msra.mxu0 %v382
        %523 = vmatpush.msra.mxu0 %v381
        %524 = vmatpush.msra.mxu0 %v380
        %525 = vmatpush.msra.mxu0 %v379
        %526 = vmatmul.f32.gmra.mxu0 %v487
        %v527 = vpop.f32.mrf.mxu0
        %v528 = vadd.f32 %v453, %v527
        %529 = vmatmul.f32.gmra.mxu0 %v490
        %v530 = vpop.f32.mrf.mxu0
        %v531 = vadd.f32 %v453, %v530
        %532 = vmatmul.f32.gmra.mxu0 %v493
        %v533 = vpop.f32.mrf.mxu0
        %v534 = vadd.f32 %v453, %v533
        %535 = vmatmul.f32.gmra.mxu0 %v496
        %v536 = vpop.f32.mrf.mxu0
        %v537 = vadd.f32 %v453, %v536
        %538 = vmatmul.f32.gmra.mxu0 %v499
        %v539 = vpop.f32.mrf.mxu0
        %v540 = vadd.f32 %v453, %v539
        %541 = vmatmul.f32.gmra.mxu0 %v502
        %v542 = vpop.f32.mrf.mxu0
        %v543 = vadd.f32 %v453, %v542
        %544 = vmatmul.f32.gmra.mxu0 %v505
        %v545 = vpop.f32.mrf.mxu0
        %v546 = vadd.f32 %v453, %v545
        %547 = vmatmul.f32.gmra.mxu0 %v508
        %v548 = vpop.f32.mrf.mxu0
        %v549 = vadd.f32 %v453, %v548
        %550 = vdwg.mxu0
        %vm551 = vcmask 523264
        %v552 = vsel %vm551, %v528, -inf
        %553 = vmax.xlane.f32.xlu0 %v552
        %v554 = vpop.xlane.xlu0 %553
        %v555 = vsel %vm551, %v531, -inf
        %556 = vmax.xlane.f32.xlu0 %v555
        %v557 = vpop.xlane.xlu0 %556
        %v558 = vsel %vm551, %v534, -inf
        %559 = vmax.xlane.f32.xlu0 %v558
        %v560 = vpop.xlane.xlu0 %559
        %v561 = vsel %vm551, %v537, -inf
        %562 = vmax.xlane.f32.xlu0 %v561
        %v563 = vpop.xlane.xlu0 %562
        %v564 = vsel %vm551, %v540, -inf
        %565 = vmax.xlane.f32.xlu0 %v564
        %v566 = vpop.xlane.xlu0 %565
        %v567 = vsel %vm551, %v543, -inf
        %568 = vmax.xlane.f32.xlu0 %v567
        %v569 = vpop.xlane.xlu0 %568
        %v570 = vsel %vm551, %v546, -inf
        %571 = vmax.xlane.f32.xlu0 %v570
        %v572 = vpop.xlane.xlu0 %571
        %v573 = vsel %vm551, %v549, -inf
        %574 = vmax.xlane.f32.xlu0 %v573
        %v575 = vpop.xlane.xlu0 %574
        %v576 = vsub.f32 %v528, %v554
        %v577 = vsub.f32 %v531, %v557
        %v578 = vsub.f32 %v534, %v560
        %v579 = vsub.f32 %v537, %v563
        %v580 = vsub.f32 %v540, %v566
        %v581 = vsub.f32 %v543, %v569
        %v582 = vsub.f32 %v546, %v572
        %v583 = vsub.f32 %v549, %v575
        %v584 = vmul.f32 %v576, 1.442695
        %v585 = vpow.pop %v584
        %v586 = vmul.f32 %v577, 1.442695
        %v587 = vpow.pop %v586
        %v588 = vmul.f32 %v578, 1.442695
        %v589 = vpow.pop %v588
        %v590 = vmul.f32 %v579, 1.442695
        %v591 = vpow.pop %v590
        %v592 = vmul.f32 %v580, 1.442695
        %v593 = vpow.pop %v592
        %v594 = vmul.f32 %v581, 1.442695
        %v595 = vpow.pop %v594
        %v596 = vmul.f32 %v582, 1.442695
        %v597 = vpow.pop %v596
        %v598 = vmul.f32 %v583, 1.442695
        %v599 = vpow.pop %v598
        %v600 = vsel %vm551, %v585, 0.0
        %601 = vadd.xlane.f32.xlu0 %v600
        %v602 = vpop.xlane.xlu0 %601
        %v603 = vsel %vm551, %v587, 0.0
        %604 = vadd.xlane.f32.xlu0 %v603
        %v605 = vpop.xlane.xlu0 %604
        %v606 = vsel %vm551, %v589, 0.0
        %607 = vadd.xlane.f32.xlu0 %v606
        %v608 = vpop.xlane.xlu0 %607
        %v609 = vsel %vm551, %v591, 0.0
        %610 = vadd.xlane.f32.xlu0 %v609
        %v611 = vpop.xlane.xlu0 %610
        %v612 = vsel %vm551, %v593, 0.0
        %613 = vadd.xlane.f32.xlu0 %v612
        %v614 = vpop.xlane.xlu0 %613
        %v615 = vsel %vm551, %v595, 0.0
        %616 = vadd.xlane.f32.xlu0 %v615
        %v617 = vpop.xlane.xlu0 %616
        %v618 = vsel %vm551, %v597, 0.0
        %619 = vadd.xlane.f32.xlu0 %v618
        %v620 = vpop.xlane.xlu0 %619
        %v621 = vsel %vm551, %v599, 0.0
        %622 = vadd.xlane.f32.xlu0 %v621
        %v623 = vpop.xlane.xlu0 %622
        %v624 = vrcp.pop %v602
        %v625 = vrcp.pop %v605
        %v626 = vrcp.pop %v608
        %v627 = vrcp.pop %v611
        %v628 = vrcp.pop %v614
        %v629 = vrcp.pop %v617
        %v630 = vrcp.pop %v620
        %v631 = vrcp.pop %v623
        %v632 = vmul.f32 %v585, %v624
        %v633 = vmul.f32 %v587, %v625
        %v634 = vmul.f32 %v589, %v626
        %v635 = vmul.f32 %v591, %v627
        %v636 = vmul.f32 %v593, %v628
        %v637 = vmul.f32 %v595, %v629
        %v638 = vmul.f32 %v597, %v630
        %v639 = vmul.f32 %v599, %v631
        %v640 = vld [vmem:[#allocation8] sm:$0xff]
        %v641 = vld [vmem:[#allocation8 + $0x8] sm:$0xff]
        %v642 = vld [vmem:[#allocation8 + $0x10] sm:$0xff]
        %v643 = vld [vmem:[#allocation8 + $0x18] sm:$0xff]
        %v644 = vld [vmem:[%s5] sm:$0xff]
        %v645 = vld [vmem:[%s5 + $0x8] sm:$0xff]
        %v646 = vld [vmem:[%s5 + $0x10] sm:$0xff]
        %v647 = vld [vmem:[%s5 + $0x18] sm:$0xff]
        %649 = vset.pattern.permute.xlu0 0
        %650 = vperm.xlu0 %649, %v644
        %v651 = vpop.permute.xlu0 %650
        %654 = vset.pattern.permute.xlu0 0
        %655 = vperm.xlu0 %654, %v645
        %v656 = vpop.permute.xlu0 %655
        %659 = vset.pattern.permute.xlu0 0
        %660 = vperm.xlu0 %659, %v646
        %v661 = vpop.permute.xlu0 %660
        %664 = vset.pattern.permute.xlu0 0
        %665 = vperm.xlu0 %664, %v647
        %v666 = vpop.permute.xlu0 %665
        %v669 = vsel %vm387, %v640, 0
        %v672 = vsel %vm387, %v641, 0
        %v675 = vsel %vm387, %v642, 0
        %v678 = vsel %vm387, %v643, 0
        %680 = vmatpush.msra.mxu0 0.0
        %681 = vmatpush.msra.mxu0 0.0
        %682 = vmatpush.msra.mxu0 0.0
        %683 = vmatpush.msra.mxu0 0.0
        %684 = vmatpush.msra.mxu0 0.0
        %685 = vmatpush.msra.mxu0 0.0
        %686 = vmatpush.msra.mxu0 0.0
        %687 = vmatpush.msra.mxu0 0.0
        %688 = vmatpush.msra.mxu0 0.0
        %689 = vmatpush.msra.mxu0 0.0
        %690 = vmatpush.msra.mxu0 0.0
        %691 = vmatpush.msra.mxu0 0.0
        %692 = vmatpush.msra.mxu0 %v382
        %693 = vmatpush.msra.mxu0 %v381
        %694 = vmatpush.msra.mxu0 %v380
        %695 = vmatpush.msra.mxu0 %v379
        %696 = vmatmul.f32.gmra.mxu0 %v669
        %v697 = vpop.f32.mrf.mxu0
        %v698 = vadd.f32 %v651, %v697
        %699 = vmatmul.f32.gmra.mxu0 %v672
        %v700 = vpop.f32.mrf.mxu0
        %v701 = vadd.f32 %v656, %v700
        %702 = vmatmul.f32.gmra.mxu0 %v675
        %v703 = vpop.f32.mrf.mxu0
        %v704 = vadd.f32 %v661, %v703
        %705 = vmatmul.f32.gmra.mxu0 %v678
        %v706 = vpop.f32.mrf.mxu0
        %v707 = vadd.f32 %v666, %v706
        %708 = vdwg.mxu0
        %v710 = vsel %vm551, %v698, 0
        %v713 = vsel %vm551, %v701, 0
        %v716 = vsel %vm551, %v704, 0
        %v719 = vsel %vm551, %v707, 0
        %v722 = vsel %vm551, %v632, 0
        %v725 = vsel %vm551, %v633, 0
        %v728 = vsel %vm551, %v634, 0
        %v731 = vsel %vm551, %v635, 0
        %v734 = vsel %vm551, %v636, 0
        %v737 = vsel %vm551, %v637, 0
        %v740 = vsel %vm551, %v638, 0
        %v743 = vsel %vm551, %v639, 0
        %745 = vmatpush.xpose.msra.mxu0 0.0
        %746 = vmatpush.xpose.msra.mxu0 0.0
        %747 = vmatpush.xpose.msra.mxu0 0.0
        %748 = vmatpush.xpose.msra.mxu0 0.0
        %749 = vmatpush.xpose.msra.mxu0 0.0
        %750 = vmatpush.xpose.msra.mxu0 0.0
        %751 = vmatpush.xpose.msra.mxu0 0.0
        %752 = vmatpush.xpose.msra.mxu0 0.0
        %753 = vmatpush.xpose.msra.mxu0 %v743
        %754 = vmatpush.xpose.msra.mxu0 %v740
        %755 = vmatpush.xpose.msra.mxu0 %v737
        %756 = vmatpush.xpose.msra.mxu0 %v734
        %757 = vmatpush.xpose.msra.mxu0 %v731
        %758 = vmatpush.xpose.msra.mxu0 %v728
        %759 = vmatpush.xpose.msra.mxu0 %v725
        %760 = vmatpush.xpose.msra.mxu0 %v722
        %761 = vmatmul.f32.gmra.mxu0 %v710
        %v762 = vpop.f32.mrf.mxu0
        %v763 = vadd.f32 0.0, %v762
        %764 = vmatmul.f32.gmra.mxu0 %v713
        %v765 = vpop.f32.mrf.mxu0
        %v766 = vadd.f32 0.0, %v765
        %767 = vmatmul.f32.gmra.mxu0 %v716
        %v768 = vpop.f32.mrf.mxu0
        %v769 = vadd.f32 0.0, %v768
        %770 = vmatmul.f32.gmra.mxu0 %v719
        %v771 = vpop.f32.mrf.mxu0
        %v772 = vadd.f32 0.0, %v771
        %773 = vdwg.mxu0
        %s774 = sld [smem:[#allocation2]]
        %v775 = vstv %s774
        %v776 = vmul.f32 %v775, %v763
        %v777 = vmul.f32 %v775, %v766
        %v778 = vmul.f32 %v775, %v769
        %v779 = vmul.f32 %v775, %v772
        %v780 = vadd.f32 %v776, %v375
        %v781 = vadd.f32 %v777, %v376
        %v782 = vadd.f32 %v778, %v377
        %v783 = vadd.f32 %v779, %v378
        %784 = vst.msk [vmem:[%s374] sm:$0xff] %vm551, %v780
        %785 = vst.msk [vmem:[%s374 + $0x8] sm:$0xff] %vm551, %v781
        %786 = vst.msk [vmem:[%s374 + $0x10] sm:$0xff] %vm551, %v782
        %787 = vst.msk [vmem:[%s374 + $0x18] sm:$0xff] %vm551, %v783
        %s788 = sand.u32 %s209, 1
        %s789 = scalar_lea.sflag [#allocation5], %s788
        %s790 = sand.u32 %s209, 1
        %s791 = smul.addr %s790, 32
        %s792 = scalar_lea.vmem [#allocation9], %s791
        // Predicated region
        $region61: #{tpu_custom_call.1} parent=47 // pred_check
          %p793 = pneg %p219
        $region62: #{tpu_custom_call.1} parent=47 // pred_check_branch
          %795 = sbr.rel (%p793) target = $region64
        $region63: #{tpu_custom_call.1} parent=47 // pred_region
          %797 = vsyncadd %s789, 0
          %s798 = smul.addr %s32, 4
          %s799 = sadd.s32 %s33, %s798
          %s800 = smul.addr %s799, 8
          %s801 = scalar_lea.hbm %s7, %s800
          %s802 = sshll.u32 %s792, 4
          %s803 = int_to_ptr.vmem [resolvable:$true] %s802
          %s804 = sshll.u32 %s801, 4
          %s805 = int_to_ptr.hbm [resolvable:$true] %s804
          %810 = dma.vmem_to_hbm [thread:$0]  %s803, 512, %s805, %s789, 128, 128, 8
        $region64: #{tpu_custom_call.1} parent=47 // pred_fallthru
          _
      $region48: #{tpu_custom_call.1} parent=5 // pred_fallthru
        _
      %p811 = scmp.le.s32.totalorder 2, %s23
      // Predicated region
      $region65: #{tpu_custom_call.1} parent=5 // pred_check
        %p812 = pneg %p811
      $region66: #{tpu_custom_call.1} parent=5 // pred_check_branch
        %814 = sbr.rel (%p812) target = $region68
      $region67: #{tpu_custom_call.1} parent=5 // pred_region
        %s815 = ssub.s32 %s23, 2
        // Predicated region
        $region69: #{tpu_custom_call.1} parent=67 // pred_check
          %p816 = pneg %p225
        $region70: #{tpu_custom_call.1} parent=67 // pred_check_branch
          %818 = sbr.rel (%p816) target = $region72
        $region71: #{tpu_custom_call.1} parent=67 // pred_region
          %s819 = sand.u32 %s210, 1
          %s820 = scalar_lea.sflag [#allocation5], %s819
          %s821 = sand.u32 %s210, 1
          %s822 = smul.addr %s821, 32
          %s823 = scalar_lea.vmem [#allocation9], %s822
          %825 = dma.done %s820, 512
        $region72: #{tpu_custom_call.1} parent=67 // pred_fallthru
          _
      $region68: #{tpu_custom_call.1} parent=5 // pred_fallthru
        _
    $region6: #{tpu_custom_call.1} parent=1 // loop_footer
      %s27 = sadd.s32 1, %s23
    $region7: #{tpu_custom_call.1} parent=1 // loop_footer_branch
      %22 = sbr.rel target = $region3
    $region8: #{tpu_custom_call.1} parent=1 // loop_exit
      _
    %826 = vsyncpa [#allocation4], 1
    %s827 = scalar_lea.sflag [#allocation4], 1
    %828 = vsyncpa %s827, 1
    %829 = vsyncpa [#allocation7], 1
    %s830 = scalar_lea.sflag [#allocation7], 1
    %831 = vsyncpa %s830, 1
    %832 = vsyncpa [#allocation5], 1
    %s833 = scalar_lea.sflag [#allocation5], 1
    %834 = vsyncpa %s833, 1

</llo_original>
